<compile_context>
chip_gen: v6e
topology: v6e:2x2x1
jax: 0.10.0
libtpu: 0.0.40
codegen_flags: <defaults>
</compile_context>

<pallas_src>
import jax
import jax.numpy as jnp
from jax.experimental import pallas as pl
from jax.experimental.pallas import tpu as pltpu


def _round_up(x, m):
    return ((x + m - 1) // m) * m


# ----------------------------------------------------------------------------
# Pallas kernel: fused MLP  y = relu( relu(x @ W1 + b1) @ W2 + b2 )
#   x, W1, W2 : bf16 (MXU-native)   b1, b2, out : f32 (accumulate / store)
# ----------------------------------------------------------------------------
def _mlp_kernel(x_ref, w1_ref, b1_ref, w2_ref, b2_ref, o_ref):
    x = x_ref[...]                                                   # (TB, 512) bf16
    h = jnp.dot(x, w1_ref[...], preferred_element_type=jnp.float32)  # MXU, f32 acc
    h = jnp.maximum(h + b1_ref[...], 0.0)                            # bias+ReLU (VPU, f32)
    y = jnp.dot(h.astype(jnp.bfloat16), w2_ref[...],
                preferred_element_type=jnp.float32)                  # MXU, f32 acc
    o_ref[...] = jnp.maximum(y + b2_ref[...], 0.0)                   # (TB, 512) f32, lane-dense


def image_encoder_mlp(emb, w1, b1, w2, b2, *, tb=256):
    """Fused Linear(512->256)+ReLU+Linear(256->512)+ReLU, batch-tiled on TPU.

    emb: (B, 512) any float dtype. w1/w2 cast to bf16; b1/b2 kept f32.
    Returns (B, 512) float32.
    """
    B = emb.shape[0]
    D_IN, D_HID = w1.shape       # (512, 256)
    _, D_OUT = w2.shape          # (256, 512)

    # Batch tile: multiple of 16 (bf16 sublane packing); don't over-pad tiny
    # batches, cap at `tb` for larger ones. Fits comfortably in VMEM on
    # v5e/v6e (128 MiB) and v7x (64 MiB, 32 MiB scoped default).
    tb = min(tb, max(16, _round_up(B, 16)))
    b_pad = _round_up(B, tb)

    x = emb.astype(jnp.bfloat16)
    if b_pad != B:
        x = jnp.pad(x, ((0, b_pad - B), (0, 0)))

    w1_b = w1.astype(jnp.bfloat16)
    w2_b = w2.astype(jnp.bfloat16)
    b1_f = b1.astype(jnp.float32).reshape(1, D_HID)
    b2_f = b2.astype(jnp.float32).reshape(1, D_OUT)

    out = pl.pallas_call(
        _mlp_kernel,
        out_shape=jax.ShapeDtypeStruct((b_pad, D_OUT), jnp.float32),
        grid=(b_pad // tb,),
        in_specs=[
            pl.BlockSpec((tb, D_IN), lambda i: (i, 0)),       # x tile: streamed
            pl.BlockSpec((D_IN, D_HID), lambda i: (0, 0)),    # W1: VMEM-resident
            pl.BlockSpec((1, D_HID), lambda i: (0, 0)),       # b1: VMEM-resident
            pl.BlockSpec((D_HID, D_OUT), lambda i: (0, 0)),   # W2: VMEM-resident
            pl.BlockSpec((1, D_OUT), lambda i: (0, 0)),       # b2: VMEM-resident
        ],
        out_specs=pl.BlockSpec((tb, D_OUT), lambda i: (i, 0)),
        compiler_params=pltpu.CompilerParams(
            dimension_semantics=("parallel",)),               # megacore-shard batch
    )(x, w1_b, b1_f, w2_b, b2_f)

    return out[:B] if b_pad != B else out


# ----------------------------------------------------------------------------
# Parameter init (PyTorch nn.Linear default: U(-1/sqrt(fan_in), 1/sqrt(fan_in)))
# ----------------------------------------------------------------------------
def init_params(key):
    k1, k2, k3, k4 = jax.random.split(key, 4)
    lim1 = 1.0 / jnp.sqrt(512.0)
    lim2 = 1.0 / jnp.sqrt(256.0)
    # Stored transposed to (in, out) so the kernel computes x @ W.
    w1 = jax.random.uniform(k1, (512, 256), jnp.float32, -lim1, lim1)
    b1 = jax.random.uniform(k2, (1, 256), jnp.float32, -lim1, lim1)
    w2 = jax.random.uniform(k3, (256, 512), jnp.float32, -lim2, lim2)
    b2 = jax.random.uniform(k4, (1, 512), jnp.float32, -lim2, lim2)
    return w1, b1, w2, b2


# TODO(synk): stand-in for the external frozen CLIP image tower (not the hot
# path; jitted together with the kernel so XLA fuses / avoids extra HBM trips).
def clip_encode_image_standin(x_nchw, key):
    B = x_nchw.shape[0]
    flat = x_nchw.reshape(B, -1).astype(jnp.float32)
    proj = jax.random.normal(key, (flat.shape[1], 512), jnp.float32) / jnp.sqrt(
        float(flat.shape[1])
    )
    return flat @ proj  # (B, 512)


@jax.jit
def image_encoder_forward(x_nchw, params, clip_key):
    emb = clip_encode_image_standin(x_nchw, clip_key)   # frozen "CLIP" part
    w1, b1, w2, b2 = params
    return image_encoder_mlp(emb, w1, b1, w2, b2)


if __name__ == "__main__":
    key = jax.random.PRNGKey(0)
    k_x, k_params, k_clip = jax.random.split(key, 3)

    # Small NCHW image batch (CLIP-style input at reduced spatial size).
    x = jax.random.normal(k_x, (2, 3, 32, 32), jnp.float32)

    params = init_params(k_params)
    out = image_encoder_forward(x, params, k_clip)
    out = jax.block_until_ready(out)

    # Pure-JAX reference of the MLP with the same bf16-operand / f32-accum math.
    emb = clip_encode_image_standin(x, k_clip)
    w1, b1, w2, b2 = params
    h_ref = jnp.maximum(
        jnp.dot(emb.astype(jnp.bfloat16), w1.astype(jnp.bfloat16),
                preferred_element_type=jnp.float32) + b1, 0.0)
    ref = jnp.maximum(
        jnp.dot(h_ref.astype(jnp.bfloat16), w2.astype(jnp.bfloat16),
                preferred_element_type=jnp.float32) + b2, 0.0)

    assert out.shape == (2, 512) and out.dtype == jnp.float32
    assert jnp.allclose(out, ref, atol=2e-2, rtol=2e-2)

    print("KERNEL_OK")
</pallas_src>

<mosaic_0001>
module attributes {stable_mosaic.version = 11 : i64} {
  func.func @_mlp_kernel(%arg0: i32, %arg1: memref<16x512xbf16, #tpu.memory_space<vmem>>, %arg2: memref<512x256xbf16, #tpu.memory_space<vmem>>, %arg3: memref<1x256xf32, #tpu.memory_space<vmem>>, %arg4: memref<256x512xbf16, #tpu.memory_space<vmem>>, %arg5: memref<1x512xf32, #tpu.memory_space<vmem>>, %arg6: memref<16x512xf32, #tpu.memory_space<vmem>>) attributes {dimension_semantics = [#tpu.dimension_semantics<parallel>], iteration_bounds = array<i64: 1>, scalar_prefetch = 0 : i64, scratch_operands = 0 : i64, tpu.core_type = #tpu.core_type<tc>, window_params = [{transform_indices = @transform_0, window_bounds = array<i64: 16, 512>}, {pipeline_mode = #tpu.pipeline_mode<synchronous>, transform_indices = @transform_1, window_bounds = array<i64: 512, 256>}, {pipeline_mode = #tpu.pipeline_mode<synchronous>, transform_indices = @transform_2, window_bounds = array<i64: 1, 256>}, {pipeline_mode = #tpu.pipeline_mode<synchronous>, transform_indices = @transform_3, window_bounds = array<i64: 256, 512>}, {pipeline_mode = #tpu.pipeline_mode<synchronous>, transform_indices = @transform_4, window_bounds = array<i64: 1, 512>}, {transform_indices = @transform_5, window_bounds = array<i64: 16, 512>}]} {
    %c0 = arith.constant 0 : index
    %c0_0 = arith.constant 0 : index
    %0 = vector.load %arg1[%c0, %c0_0] : memref<16x512xbf16, #tpu.memory_space<vmem>>, vector<16x512xbf16>
    %c0_1 = arith.constant 0 : index
    %c0_2 = arith.constant 0 : index
    %1 = vector.load %arg2[%c0_1, %c0_2] : memref<512x256xbf16, #tpu.memory_space<vmem>>, vector<512x256xbf16>
    %cst = arith.constant dense<0.000000e+00> : vector<16x256xf32>
    %2 = tpu.matmul %0, %1, %cst {dimension_numbers = #tpu.dot_dimension_numbers<[1], [0], [0], [1], [0, 0, 1, 1], [], []>} : vector<16x512xbf16>, vector<512x256xbf16>, vector<16x256xf32> -> vector<16x256xf32>
    %c0_3 = arith.constant 0 : index
    %c0_4 = arith.constant 0 : index
    %3 = vector.load %arg3[%c0_3, %c0_4] : memref<1x256xf32, #tpu.memory_space<vmem>>, vector<1x256xf32>
    %4 = vector.broadcast %3 : vector<1x256xf32> to vector<16x256xf32>
    %5 = arith.addf %2, %4 : vector<16x256xf32>
    %cst_5 = arith.constant 0.000000e+00 : f32
    %6 = vector.broadcast %cst_5 : f32 to vector<16x256xf32>
    %7 = arith.maximumf %5, %6 : vector<16x256xf32>
    %8 = arith.truncf %7 : vector<16x256xf32> to vector<16x256xbf16>
    %c0_6 = arith.constant 0 : index
    %c0_7 = arith.constant 0 : index
    %9 = vector.load %arg4[%c0_6, %c0_7] : memref<256x512xbf16, #tpu.memory_space<vmem>>, vector<256x512xbf16>
    %cst_8 = arith.constant dense<0.000000e+00> : vector<16x512xf32>
    %10 = tpu.matmul %8, %9, %cst_8 {dimension_numbers = #tpu.dot_dimension_numbers<[1], [0], [0], [1], [0, 0, 1, 1], [], []>} : vector<16x256xbf16>, vector<256x512xbf16>, vector<16x512xf32> -> vector<16x512xf32>
    %c0_9 = arith.constant 0 : index
    %c0_10 = arith.constant 0 : index
    %11 = vector.load %arg5[%c0_9, %c0_10] : memref<1x512xf32, #tpu.memory_space<vmem>>, vector<1x512xf32>
    %12 = vector.broadcast %11 : vector<1x512xf32> to vector<16x512xf32>
    %13 = arith.addf %10, %12 : vector<16x512xf32>
    %cst_11 = arith.constant 0.000000e+00 : f32
    %14 = vector.broadcast %cst_11 : f32 to vector<16x512xf32>
    %15 = arith.maximumf %13, %14 : vector<16x512xf32>
    %c0_12 = arith.constant 0 : index
    %c0_13 = arith.constant 0 : index
    %16 = vector.load %arg6[%c0_12, %c0_13] : memref<16x512xf32, #tpu.memory_space<vmem>>, vector<16x512xf32>
    tpu.vector_store %arg6[%c0_12, %c0_13], %15 {strides = array<i32>} : memref<16x512xf32, #tpu.memory_space<vmem>>, vector<16x512xf32>,
    return
  }
  func.func @transform_0(%arg0: i32) -> (i32, i32) {
    %c0_i32 = arith.constant 0 : i32
    %c0_i32_0 = arith.constant 0 : i32
    return %arg0, %c0_i32 : i32, i32
  }
  func.func @transform_1(%arg0: i32) -> (i32, i32) {
    %c0_i32 = arith.constant 0 : i32
    %c0_i32_0 = arith.constant 0 : i32
    %c0_i32_1 = arith.constant 0 : i32
    return %c0_i32, %c0_i32_0 : i32, i32
  }
  func.func @transform_2(%arg0: i32) -> (i32, i32) {
    %c0_i32 = arith.constant 0 : i32
    %c0_i32_0 = arith.constant 0 : i32
    %c0_i32_1 = arith.constant 0 : i32
    return %c0_i32, %c0_i32_0 : i32, i32
  }
  func.func @transform_3(%arg0: i32) -> (i32, i32) {
    %c0_i32 = arith.constant 0 : i32
    %c0_i32_0 = arith.constant 0 : i32
    %c0_i32_1 = arith.constant 0 : i32
    return %c0_i32, %c0_i32_0 : i32, i32
  }
  func.func @transform_4(%arg0: i32) -> (i32, i32) {
    %c0_i32 = arith.constant 0 : i32
    %c0_i32_0 = arith.constant 0 : i32
    %c0_i32_1 = arith.constant 0 : i32
    return %c0_i32, %c0_i32_0 : i32, i32
  }
  func.func @transform_5(%arg0: i32) -> (i32, i32) {
    %c0_i32 = arith.constant 0 : i32
    %c0_i32_0 = arith.constant 0 : i32
    return %arg0, %c0_i32 : i32, i32
  }
}

</mosaic_0001>

<llo_original>
// kernel: image_encoder_forward.1
$region0: #{image_encoder_forward.1}
  #allocation0 [shape = 'u32[]', space=smem, size = 0x4, offset = 0x4, fixed_abs, tag = 'smem constant byte address 0x4 - core index']
  #allocation1 [shape = 'u32[144,128]{1,0:T(1,128)}', space=vmem, size = 0x12000, scoped, tag = 'internal scratch']
  %s0 = inlined_call_operand.vmem [shape: bf16[16,512], index: 0, kind: input, shape index: {}]
  %s1 = inlined_call_operand.vmem [shape: bf16[512,256], index: 1, kind: input, shape index: {}]
  %s2 = inlined_call_operand.vmem [shape: f32[1,256], index: 2, kind: input, shape index: {}]
  %s3 = inlined_call_operand.vmem [shape: bf16[256,512], index: 3, kind: input, shape index: {}]
  %s4 = inlined_call_operand.vmem [shape: f32[1,512], index: 4, kind: input, shape index: {}]
  %s5 = inlined_call_operand.vmem [shape: f32[16,512], index: 5, kind: output, shape index: {}]
  %s6 = sld [smem:[#allocation0]]
  $region30: #{image_encoder_forward.1} parent=0
    _
  %s8 = ssub.s32 1, %s6
  %s9 = scalar_select 0, %s8, %s6
  // Predicated region
  $region2: #{image_encoder_forward.1} parent=0 // pred_check
    _
  $region3: #{image_encoder_forward.1} parent=0 // pred_check_branch
    %11 = sbr.rel (0) target = $region5
  $region4: #{image_encoder_forward.1} parent=0 // pred_region
    _
  $region5: #{image_encoder_forward.1} parent=0 // pred_fallthru
    _
  // Predicated region
  $region6: #{image_encoder_forward.1} parent=0 // pred_check
    _
  $region7: #{image_encoder_forward.1} parent=0 // pred_check_branch
    %13 = sbr.rel (0) target = $region9
  $region8: #{image_encoder_forward.1} parent=0 // pred_region
    _
  $region9: #{image_encoder_forward.1} parent=0 // pred_fallthru
    _
  // Predicated region
  $region10: #{image_encoder_forward.1} parent=0 // pred_check
    _
  $region11: #{image_encoder_forward.1} parent=0 // pred_check_branch
    %15 = sbr.rel (0) target = $region13
  $region12: #{image_encoder_forward.1} parent=0 // pred_region
    _
  $region13: #{image_encoder_forward.1} parent=0 // pred_fallthru
    _
  // Predicated region
  $region14: #{image_encoder_forward.1} parent=0 // pred_check
    _
  $region15: #{image_encoder_forward.1} parent=0 // pred_check_branch
    %17 = sbr.rel (0) target = $region17
  $region16: #{image_encoder_forward.1} parent=0 // pred_region
    _
  $region17: #{image_encoder_forward.1} parent=0 // pred_fallthru
    _
  // Predicated region
  $region18: #{image_encoder_forward.1} parent=0 // pred_check
    _
  $region19: #{image_encoder_forward.1} parent=0 // pred_check_branch
    %19 = sbr.rel (0) target = $region21
  $region20: #{image_encoder_forward.1} parent=0 // pred_region
    _
  $region21: #{image_encoder_forward.1} parent=0 // pred_fallthru
    _
  %v20 = vld [vmem:[%s0] sm:$0xff]
  %v21 = vld [vmem:[%s0 + $0x8] sm:$0xff]
  %v22 = vld [vmem:[%s0 + $0x10] sm:$0xff]
  %v23 = vld [vmem:[%s0 + $0x18] sm:$0xff]
  %v24 = vld [vmem:[%s1] sm:$0xff]
  %v25 = vld [vmem:[%s1 + $0x8] sm:$0xff]
  %v26 = vld [vmem:[%s1 + $0x10] sm:$0xff]
  %v27 = vld [vmem:[%s1 + $0x18] sm:$0xff]
  %v28 = vld [vmem:[%s1 + $0x20] sm:$0xff]
  %v29 = vld [vmem:[%s1 + $0x28] sm:$0xff]
  %v30 = vld [vmem:[%s1 + $0x30] sm:$0xff]
  %v31 = vld [vmem:[%s1 + $0x38] sm:$0xff]
  %v32 = vld [vmem:[%s1 + $0x40] sm:$0xff]
  %v33 = vld [vmem:[%s1 + $0x48] sm:$0xff]
  %v34 = vld [vmem:[%s1 + $0x50] sm:$0xff]
  %v35 = vld [vmem:[%s1 + $0x58] sm:$0xff]
  %v36 = vld [vmem:[%s1 + $0x60] sm:$0xff]
  %v37 = vld [vmem:[%s1 + $0x68] sm:$0xff]
  %v38 = vld [vmem:[%s1 + $0x70] sm:$0xff]
  %v39 = vld [vmem:[%s1 + $0x78] sm:$0xff]
  %v40 = vld [vmem:[%s1 + $0x80] sm:$0xff]
  %v41 = vld [vmem:[%s1 + $0x88] sm:$0xff]
  %v42 = vld [vmem:[%s1 + $0x90] sm:$0xff]
  %v43 = vld [vmem:[%s1 + $0x98] sm:$0xff]
  %v44 = vld [vmem:[%s1 + $0xa0] sm:$0xff]
  %v45 = vld [vmem:[%s1 + $0xa8] sm:$0xff]
  %v46 = vld [vmem:[%s1 + $0xb0] sm:$0xff]
  %v47 = vld [vmem:[%s1 + $0xb8] sm:$0xff]
  %v48 = vld [vmem:[%s1 + $0xc0] sm:$0xff]
  %v49 = vld [vmem:[%s1 + $0xc8] sm:$0xff]
  %v50 = vld [vmem:[%s1 + $0xd0] sm:$0xff]
  %v51 = vld [vmem:[%s1 + $0xd8] sm:$0xff]
  %v52 = vld [vmem:[%s1 + $0xe0] sm:$0xff]
  %v53 = vld [vmem:[%s1 + $0xe8] sm:$0xff]
  %v54 = vld [vmem:[%s1 + $0xf0] sm:$0xff]
  %v55 = vld [vmem:[%s1 + $0xf8] sm:$0xff]
  %v56 = vld [vmem:[%s1 + $0x100] sm:$0xff]
  %v57 = vld [vmem:[%s1 + $0x108] sm:$0xff]
  %v58 = vld [vmem:[%s1 + $0x110] sm:$0xff]
  %v59 = vld [vmem:[%s1 + $0x118] sm:$0xff]
  %v60 = vld [vmem:[%s1 + $0x120] sm:$0xff]
  %v61 = vld [vmem:[%s1 + $0x128] sm:$0xff]
  %v62 = vld [vmem:[%s1 + $0x130] sm:$0xff]
  %v63 = vld [vmem:[%s1 + $0x138] sm:$0xff]
  %v64 = vld [vmem:[%s1 + $0x140] sm:$0xff]
  %v65 = vld [vmem:[%s1 + $0x148] sm:$0xff]
  %v66 = vld [vmem:[%s1 + $0x150] sm:$0xff]
  %v67 = vld [vmem:[%s1 + $0x158] sm:$0xff]
  %v68 = vld [vmem:[%s1 + $0x160] sm:$0xff]
  %v69 = vld [vmem:[%s1 + $0x168] sm:$0xff]
  %v70 = vld [vmem:[%s1 + $0x170] sm:$0xff]
  %v71 = vld [vmem:[%s1 + $0x178] sm:$0xff]
  %v72 = vld [vmem:[%s1 + $0x180] sm:$0xff]
  %v73 = vld [vmem:[%s1 + $0x188] sm:$0xff]
  %v74 = vld [vmem:[%s1 + $0x190] sm:$0xff]
  %v75 = vld [vmem:[%s1 + $0x198] sm:$0xff]
  %v76 = vld [vmem:[%s1 + $0x1a0] sm:$0xff]
  %v77 = vld [vmem:[%s1 + $0x1a8] sm:$0xff]
  %v78 = vld [vmem:[%s1 + $0x1b0] sm:$0xff]
  %v79 = vld [vmem:[%s1 + $0x1b8] sm:$0xff]
  %v80 = vld [vmem:[%s1 + $0x1c0] sm:$0xff]
  %v81 = vld [vmem:[%s1 + $0x1c8] sm:$0xff]
  %v82 = vld [vmem:[%s1 + $0x1d0] sm:$0xff]
  %v83 = vld [vmem:[%s1 + $0x1d8] sm:$0xff]
  %v84 = vld [vmem:[%s1 + $0x1e0] sm:$0xff]
  %v85 = vld [vmem:[%s1 + $0x1e8] sm:$0xff]
  %v86 = vld [vmem:[%s1 + $0x1f0] sm:$0xff]
  %v87 = vld [vmem:[%s1 + $0x1f8] sm:$0xff]
  %v88 = vld [vmem:[%s2] sm:$0x3]
  %v90 = vlaneseq
  %v91 = vshrl.u32 %v90, 7
  %v92 = vsub.s32 0, %v91
  %v93 = vrot.slane %v88, %v92
  %v94 = vlaneseq
  %v95 = vshrl.u32 %v94, 7
  %v96 = vsub.s32 1, %v95
  %v97 = vrot.slane %v88, %v96
  %v104 = vunpack.c.l.b16 %v20
  %v105 = vunpack.c.h.b16 %v20
  %v106 = vunpack.c.l.b16 %v21
  %v107 = vunpack.c.h.b16 %v21
  %v108 = vunpack.c.l.b16 %v22
  %v109 = vunpack.c.h.b16 %v22
  %v110 = vunpack.c.l.b16 %v23
  %v111 = vunpack.c.h.b16 %v23
  %v112 = vpack.c.b16 %v108, %v104
  %v113 = vpack.c.b16 %v109, %v105
  %v114 = vpack.c.b16 %v110, %v106
  %v115 = vpack.c.b16 %v111, %v107
  %v184 = vunpack.c.l.b16 %v24
  %v185 = vunpack.c.h.b16 %v24
  %v186 = vunpack.c.l.b16 %v25
  %v187 = vunpack.c.h.b16 %v25
  %v188 = vunpack.c.l.b16 %v26
  %v189 = vunpack.c.h.b16 %v26
  %v190 = vunpack.c.l.b16 %v27
  %v191 = vunpack.c.h.b16 %v27
  %v192 = vunpack.c.l.b16 %v28
  %v193 = vunpack.c.h.b16 %v28
  %v194 = vunpack.c.l.b16 %v29
  %v195 = vunpack.c.h.b16 %v29
  %v196 = vunpack.c.l.b16 %v30
  %v197 = vunpack.c.h.b16 %v30
  %v198 = vunpack.c.l.b16 %v31
  %v199 = vunpack.c.h.b16 %v31
  %v200 = vunpack.c.l.b16 %v32
  %v201 = vunpack.c.h.b16 %v32
  %v202 = vunpack.c.l.b16 %v33
  %v203 = vunpack.c.h.b16 %v33
  %v204 = vunpack.c.l.b16 %v34
  %v205 = vunpack.c.h.b16 %v34
  %v206 = vunpack.c.l.b16 %v35
  %v207 = vunpack.c.h.b16 %v35
  %v208 = vunpack.c.l.b16 %v36
  %v209 = vunpack.c.h.b16 %v36
  %v210 = vunpack.c.l.b16 %v37
  %v211 = vunpack.c.h.b16 %v37
  %v212 = vunpack.c.l.b16 %v38
  %v213 = vunpack.c.h.b16 %v38
  %v214 = vunpack.c.l.b16 %v39
  %v215 = vunpack.c.h.b16 %v39
  %v216 = vunpack.c.l.b16 %v40
  %v217 = vunpack.c.h.b16 %v40
  %v218 = vunpack.c.l.b16 %v41
  %v219 = vunpack.c.h.b16 %v41
  %v220 = vunpack.c.l.b16 %v42
  %v221 = vunpack.c.h.b16 %v42
  %v222 = vunpack.c.l.b16 %v43
  %v223 = vunpack.c.h.b16 %v43
  %v224 = vunpack.c.l.b16 %v44
  %v225 = vunpack.c.h.b16 %v44
  %v226 = vunpack.c.l.b16 %v45
  %v227 = vunpack.c.h.b16 %v45
  %v228 = vunpack.c.l.b16 %v46
  %v229 = vunpack.c.h.b16 %v46
  %v230 = vunpack.c.l.b16 %v47
  %v231 = vunpack.c.h.b16 %v47
  %v232 = vunpack.c.l.b16 %v48
  %v233 = vunpack.c.h.b16 %v48
  %v234 = vunpack.c.l.b16 %v49
  %v235 = vunpack.c.h.b16 %v49
  %v236 = vunpack.c.l.b16 %v50
  %v237 = vunpack.c.h.b16 %v50
  %v238 = vunpack.c.l.b16 %v51
  %v239 = vunpack.c.h.b16 %v51
  %v240 = vunpack.c.l.b16 %v52
  %v241 = vunpack.c.h.b16 %v52
  %v242 = vunpack.c.l.b16 %v53
  %v243 = vunpack.c.h.b16 %v53
  %v244 = vunpack.c.l.b16 %v54
  %v245 = vunpack.c.h.b16 %v54
  %v246 = vunpack.c.l.b16 %v55
  %v247 = vunpack.c.h.b16 %v55
  %v248 = vunpack.c.l.b16 %v56
  %v249 = vunpack.c.h.b16 %v56
  %v250 = vunpack.c.l.b16 %v57
  %v251 = vunpack.c.h.b16 %v57
  %v252 = vunpack.c.l.b16 %v58
  %v253 = vunpack.c.h.b16 %v58
  %v254 = vunpack.c.l.b16 %v59
  %v255 = vunpack.c.h.b16 %v59
  %v256 = vunpack.c.l.b16 %v60
  %v257 = vunpack.c.h.b16 %v60
  %v258 = vunpack.c.l.b16 %v61
  %v259 = vunpack.c.h.b16 %v61
  %v260 = vunpack.c.l.b16 %v62
  %v261 = vunpack.c.h.b16 %v62
  %v262 = vunpack.c.l.b16 %v63
  %v263 = vunpack.c.h.b16 %v63
  %v264 = vunpack.c.l.b16 %v64
  %v265 = vunpack.c.h.b16 %v64
  %v266 = vunpack.c.l.b16 %v65
  %v267 = vunpack.c.h.b16 %v65
  %v268 = vunpack.c.l.b16 %v66
  %v269 = vunpack.c.h.b16 %v66
  %v270 = vunpack.c.l.b16 %v67
  %v271 = vunpack.c.h.b16 %v67
  %v272 = vunpack.c.l.b16 %v68
  %v273 = vunpack.c.h.b16 %v68
  %v274 = vunpack.c.l.b16 %v69
  %v275 = vunpack.c.h.b16 %v69
  %v276 = vunpack.c.l.b16 %v70
  %v277 = vunpack.c.h.b16 %v70
  %v278 = vunpack.c.l.b16 %v71
  %v279 = vunpack.c.h.b16 %v71
  %v280 = vunpack.c.l.b16 %v72
  %v281 = vunpack.c.h.b16 %v72
  %v282 = vunpack.c.l.b16 %v73
  %v283 = vunpack.c.h.b16 %v73
  %v284 = vunpack.c.l.b16 %v74
  %v285 = vunpack.c.h.b16 %v74
  %v286 = vunpack.c.l.b16 %v75
  %v287 = vunpack.c.h.b16 %v75
  %v288 = vunpack.c.l.b16 %v76
  %v289 = vunpack.c.h.b16 %v76
  %v290 = vunpack.c.l.b16 %v77
  %v291 = vunpack.c.h.b16 %v77
  %v292 = vunpack.c.l.b16 %v78
  %v293 = vunpack.c.h.b16 %v78
  %v294 = vunpack.c.l.b16 %v79
  %v295 = vunpack.c.h.b16 %v79
  %v296 = vunpack.c.l.b16 %v80
  %v297 = vunpack.c.h.b16 %v80
  %v298 = vunpack.c.l.b16 %v81
  %v299 = vunpack.c.h.b16 %v81
  %v300 = vunpack.c.l.b16 %v82
  %v301 = vunpack.c.h.b16 %v82
  %v302 = vunpack.c.l.b16 %v83
  %v303 = vunpack.c.h.b16 %v83
  %v304 = vunpack.c.l.b16 %v84
  %v305 = vunpack.c.h.b16 %v84
  %v306 = vunpack.c.l.b16 %v85
  %v307 = vunpack.c.h.b16 %v85
  %v308 = vunpack.c.l.b16 %v86
  %v309 = vunpack.c.h.b16 %v86
  %v310 = vunpack.c.l.b16 %v87
  %v311 = vunpack.c.h.b16 %v87
  %v312 = vpack.c.b16 %v186, %v184
  %v313 = vpack.c.b16 %v187, %v185
  %v314 = vpack.c.b16 %v190, %v188
  %v315 = vpack.c.b16 %v191, %v189
  %v316 = vpack.c.b16 %v194, %v192
  %v317 = vpack.c.b16 %v195, %v193
  %v318 = vpack.c.b16 %v198, %v196
  %v319 = vpack.c.b16 %v199, %v197
  %v320 = vpack.c.b16 %v202, %v200
  %v321 = vpack.c.b16 %v203, %v201
  %v322 = vpack.c.b16 %v206, %v204
  %v323 = vpack.c.b16 %v207, %v205
  %v324 = vpack.c.b16 %v210, %v208
  %v325 = vpack.c.b16 %v211, %v209
  %v326 = vpack.c.b16 %v214, %v212
  %v327 = vpack.c.b16 %v215, %v213
  %v328 = vpack.c.b16 %v218, %v216
  %v329 = vpack.c.b16 %v219, %v217
  %v330 = vpack.c.b16 %v222, %v220
  %v331 = vpack.c.b16 %v223, %v221
  %v332 = vpack.c.b16 %v226, %v224
  %v333 = vpack.c.b16 %v227, %v225
  %v334 = vpack.c.b16 %v230, %v228
  %v335 = vpack.c.b16 %v231, %v229
  %v336 = vpack.c.b16 %v234, %v232
  %v337 = vpack.c.b16 %v235, %v233
  %v338 = vpack.c.b16 %v238, %v236
  %v339 = vpack.c.b16 %v239, %v237
  %v340 = vpack.c.b16 %v242, %v240
  %v341 = vpack.c.b16 %v243, %v241
  %v342 = vpack.c.b16 %v246, %v244
  %v343 = vpack.c.b16 %v247, %v245
  %v344 = vpack.c.b16 %v250, %v248
  %v345 = vpack.c.b16 %v251, %v249
  %v346 = vpack.c.b16 %v254, %v252
  %v347 = vpack.c.b16 %v255, %v253
  %v348 = vpack.c.b16 %v258, %v256
  %v349 = vpack.c.b16 %v259, %v257
  %v350 = vpack.c.b16 %v262, %v260
  %v351 = vpack.c.b16 %v263, %v261
  %v352 = vpack.c.b16 %v266, %v264
  %v353 = vpack.c.b16 %v267, %v265
  %v354 = vpack.c.b16 %v270, %v268
  %v355 = vpack.c.b16 %v271, %v269
  %v356 = vpack.c.b16 %v274, %v272
  %v357 = vpack.c.b16 %v275, %v273
  %v358 = vpack.c.b16 %v278, %v276
  %v359 = vpack.c.b16 %v279, %v277
  %v360 = vpack.c.b16 %v282, %v280
  %v361 = vpack.c.b16 %v283, %v281
  %v362 = vpack.c.b16 %v286, %v284
  %v363 = vpack.c.b16 %v287, %v285
  %v364 = vpack.c.b16 %v290, %v288
  %v365 = vpack.c.b16 %v291, %v289
  %v366 = vpack.c.b16 %v294, %v292
  %v367 = vpack.c.b16 %v295, %v293
  %v368 = vpack.c.b16 %v298, %v296
  %v369 = vpack.c.b16 %v299, %v297
  %v370 = vpack.c.b16 %v302, %v300
  %v371 = vpack.c.b16 %v303, %v301
  %v372 = vpack.c.b16 %v306, %v304
  %v373 = vpack.c.b16 %v307, %v305
  %v374 = vpack.c.b16 %v310, %v308
  %v375 = vpack.c.b16 %v311, %v309
  %440 = vmatprep.subr.bf16.mxu0 %v327
  %441 = vmatpush1.bf16.msra.mxu0 %v326
  %442 = vmatprep.subr.bf16.mxu0 %v325
  %443 = vmatpush1.bf16.msra.mxu0 %v324
  %444 = vmatprep.subr.bf16.mxu0 %v323
  %445 = vmatpush1.bf16.msra.mxu0 %v322
  %446 = vmatprep.subr.bf16.mxu0 %v321
  %447 = vmatpush1.bf16.msra.mxu0 %v320
  %448 = vmatprep.subr.bf16.mxu0 %v319
  %449 = vmatpush1.bf16.msra.mxu0 %v318
  %450 = vmatprep.subr.bf16.mxu0 %v317
  %451 = vmatpush1.bf16.msra.mxu0 %v316
  %452 = vmatprep.subr.bf16.mxu0 %v315
  %453 = vmatpush1.bf16.msra.mxu0 %v314
  %454 = vmatprep.subr.bf16.mxu0 %v313
  %455 = vmatpush1.bf16.msra.mxu0 %v312
  %456 = vmatprep.subr.bf16.mxu0 %v343
  %457 = vmatpush2.bf16.msra.mxu0 %v342
  %458 = vmatprep.subr.bf16.mxu0 %v341
  %459 = vmatpush2.bf16.msra.mxu0 %v340
  %460 = vmatprep.subr.bf16.mxu0 %v339
  %461 = vmatpush2.bf16.msra.mxu0 %v338
  %462 = vmatprep.subr.bf16.mxu0 %v337
  %463 = vmatpush2.bf16.msra.mxu0 %v336
  %464 = vmatprep.subr.bf16.mxu0 %v335
  %465 = vmatpush2.bf16.msra.mxu0 %v334
  %466 = vmatprep.subr.bf16.mxu0 %v333
  %467 = vmatpush2.bf16.msra.mxu0 %v332
  %468 = vmatprep.subr.bf16.mxu0 %v331
  %469 = vmatpush2.bf16.msra.mxu0 %v330
  %470 = vmatprep.subr.bf16.mxu0 %v329
  %471 = vmatpush2.bf16.msra.mxu0 %v328
  %472 = vmatprep.mubr.bf16.mxu0 %v113
  %473 = vmatmul.mubr.bf16.gmra.mxu0 %v112
  %v474 = vpop.f32.mrf.mxu0
  %v475 = vadd.f32 %v93, %v474
  %v476 = vpop.f32.mrf.mxu0
  %v477 = vadd.f32 %v97, %v476
  %v478 = vpop.f32.mrf.mxu0
  %v479 = vadd.f32 %v93, %v478
  %v480 = vpop.f32.mrf.mxu0
  %v481 = vadd.f32 %v97, %v480
  %482 = vdwg.mxu0
  %483 = vmatprep.subr.bf16.mxu0 %v359
  %484 = vmatpush1.bf16.msra.mxu0 %v358
  %485 = vmatprep.subr.bf16.mxu0 %v357
  %486 = vmatpush1.bf16.msra.mxu0 %v356
  %487 = vmatprep.subr.bf16.mxu0 %v355
  %488 = vmatpush1.bf16.msra.mxu0 %v354
  %489 = vmatprep.subr.bf16.mxu0 %v353
  %490 = vmatpush1.bf16.msra.mxu0 %v352
  %491 = vmatprep.subr.bf16.mxu0 %v351
  %492 = vmatpush1.bf16.msra.mxu0 %v350
  %493 = vmatprep.subr.bf16.mxu0 %v349
  %494 = vmatpush1.bf16.msra.mxu0 %v348
  %495 = vmatprep.subr.bf16.mxu0 %v347
  %496 = vmatpush1.bf16.msra.mxu0 %v346
  %497 = vmatprep.subr.bf16.mxu0 %v345
  %498 = vmatpush1.bf16.msra.mxu0 %v344
  %499 = vmatprep.subr.bf16.mxu0 %v375
  %500 = vmatpush2.bf16.msra.mxu0 %v374
  %501 = vmatprep.subr.bf16.mxu0 %v373
  %502 = vmatpush2.bf16.msra.mxu0 %v372
  %503 = vmatprep.subr.bf16.mxu0 %v371
  %504 = vmatpush2.bf16.msra.mxu0 %v370
  %505 = vmatprep.subr.bf16.mxu0 %v369
  %506 = vmatpush2.bf16.msra.mxu0 %v368
  %507 = vmatprep.subr.bf16.mxu0 %v367
  %508 = vmatpush2.bf16.msra.mxu0 %v366
  %509 = vmatprep.subr.bf16.mxu0 %v365
  %510 = vmatpush2.bf16.msra.mxu0 %v364
  %511 = vmatprep.subr.bf16.mxu0 %v363
  %512 = vmatpush2.bf16.msra.mxu0 %v362
  %513 = vmatprep.subr.bf16.mxu0 %v361
  %514 = vmatpush2.bf16.msra.mxu0 %v360
  %515 = vmatprep.mubr.bf16.mxu0 %v115
  %516 = vmatmul.mubr.bf16.gmra.mxu0 %v114
  %v517 = vpop.f32.mrf.mxu0
  %v518 = vadd.f32 %v475, %v517
  %v519 = vpop.f32.mrf.mxu0
  %v520 = vadd.f32 %v477, %v519
  %v521 = vpop.f32.mrf.mxu0
  %v522 = vadd.f32 %v479, %v521
  %v523 = vpop.f32.mrf.mxu0
  %v524 = vadd.f32 %v481, %v523
  %525 = vdwg.mxu0
  %v526 = vmax.f32 %v518, 0.0
  %v527 = vmax.f32 %v520, 0.0
  %v528 = vmax.f32 %v522, 0.0
  %v529 = vmax.f32 %v524, 0.0
  %v530 = vpack.c.bf16 %v528, %v526
  %v531 = vpack.c.bf16 %v529, %v527
  %v532 = vld [vmem:[%s3] sm:$0xff]
  %v533 = vld [vmem:[%s3 + $0x8] sm:$0xff]
  %v534 = vld [vmem:[%s3 + $0x10] sm:$0xff]
  %v535 = vld [vmem:[%s3 + $0x18] sm:$0xff]
  %v536 = vld [vmem:[%s3 + $0x20] sm:$0xff]
  %v537 = vld [vmem:[%s3 + $0x28] sm:$0xff]
  %v538 = vld [vmem:[%s3 + $0x30] sm:$0xff]
  %v539 = vld [vmem:[%s3 + $0x38] sm:$0xff]
  %v540 = vld [vmem:[%s3 + $0x40] sm:$0xff]
  %v541 = vld [vmem:[%s3 + $0x48] sm:$0xff]
  %v542 = vld [vmem:[%s3 + $0x50] sm:$0xff]
  %v543 = vld [vmem:[%s3 + $0x58] sm:$0xff]
  %v544 = vld [vmem:[%s3 + $0x60] sm:$0xff]
  %v545 = vld [vmem:[%s3 + $0x68] sm:$0xff]
  %v546 = vld [vmem:[%s3 + $0x70] sm:$0xff]
  %v547 = vld [vmem:[%s3 + $0x78] sm:$0xff]
  %v548 = vld [vmem:[%s3 + $0x80] sm:$0xff]
  %v549 = vld [vmem:[%s3 + $0x88] sm:$0xff]
  %v550 = vld [vmem:[%s3 + $0x90] sm:$0xff]
  %v551 = vld [vmem:[%s3 + $0x98] sm:$0xff]
  %v552 = vld [vmem:[%s3 + $0xa0] sm:$0xff]
  %v553 = vld [vmem:[%s3 + $0xa8] sm:$0xff]
  %v554 = vld [vmem:[%s3 + $0xb0] sm:$0xff]
  %v555 = vld [vmem:[%s3 + $0xb8] sm:$0xff]
  %v556 = vld [vmem:[%s3 + $0xc0] sm:$0xff]
  %v557 = vld [vmem:[%s3 + $0xc8] sm:$0xff]
  %v558 = vld [vmem:[%s3 + $0xd0] sm:$0xff]
  %v559 = vld [vmem:[%s3 + $0xd8] sm:$0xff]
  %v560 = vld [vmem:[%s3 + $0xe0] sm:$0xff]
  %v561 = vld [vmem:[%s3 + $0xe8] sm:$0xff]
  %v562 = vld [vmem:[%s3 + $0xf0] sm:$0xff]
  %v563 = vld [vmem:[%s3 + $0xf8] sm:$0xff]
  %v564 = vld [vmem:[%s3 + $0x100] sm:$0xff]
  %v565 = vld [vmem:[%s3 + $0x108] sm:$0xff]
  %v566 = vld [vmem:[%s3 + $0x110] sm:$0xff]
  %v567 = vld [vmem:[%s3 + $0x118] sm:$0xff]
  %v568 = vld [vmem:[%s3 + $0x120] sm:$0xff]
  %v569 = vld [vmem:[%s3 + $0x128] sm:$0xff]
  %v570 = vld [vmem:[%s3 + $0x130] sm:$0xff]
  %v571 = vld [vmem:[%s3 + $0x138] sm:$0xff]
  %v572 = vld [vmem:[%s3 + $0x140] sm:$0xff]
  %v573 = vld [vmem:[%s3 + $0x148] sm:$0xff]
  %v574 = vld [vmem:[%s3 + $0x150] sm:$0xff]
  %v575 = vld [vmem:[%s3 + $0x158] sm:$0xff]
  %v576 = vld [vmem:[%s3 + $0x160] sm:$0xff]
  %v577 = vld [vmem:[%s3 + $0x168] sm:$0xff]
  %v578 = vld [vmem:[%s3 + $0x170] sm:$0xff]
  %v579 = vld [vmem:[%s3 + $0x178] sm:$0xff]
  %v580 = vld [vmem:[%s3 + $0x180] sm:$0xff]
  %v581 = vld [vmem:[%s3 + $0x188] sm:$0xff]
  %v582 = vld [vmem:[%s3 + $0x190] sm:$0xff]
  %v583 = vld [vmem:[%s3 + $0x198] sm:$0xff]
  %v584 = vld [vmem:[%s3 + $0x1a0] sm:$0xff]
  %v585 = vld [vmem:[%s3 + $0x1a8] sm:$0xff]
  %v586 = vld [vmem:[%s3 + $0x1b0] sm:$0xff]
  %v587 = vld [vmem:[%s3 + $0x1b8] sm:$0xff]
  %v588 = vld [vmem:[%s3 + $0x1c0] sm:$0xff]
  %v589 = vld [vmem:[%s3 + $0x1c8] sm:$0xff]
  %v590 = vld [vmem:[%s3 + $0x1d0] sm:$0xff]
  %v591 = vld [vmem:[%s3 + $0x1d8] sm:$0xff]
  %v592 = vld [vmem:[%s3 + $0x1e0] sm:$0xff]
  %v593 = vld [vmem:[%s3 + $0x1e8] sm:$0xff]
  %v594 = vld [vmem:[%s3 + $0x1f0] sm:$0xff]
  %v595 = vld [vmem:[%s3 + $0x1f8] sm:$0xff]
  %v596 = vld [vmem:[%s4] sm:$0xf]
  %v598 = vlaneseq
  %v599 = vshrl.u32 %v598, 7
  %v600 = vsub.s32 0, %v599
  %v601 = vrot.slane %v596, %v600
  %v602 = vlaneseq
  %v603 = vshrl.u32 %v602, 7
  %v604 = vsub.s32 1, %v603
  %v605 = vrot.slane %v596, %v604
  %v606 = vlaneseq
  %v607 = vshrl.u32 %v606, 7
  %v608 = vsub.s32 2, %v607
  %v609 = vrot.slane %v596, %v608
  %v610 = vlaneseq
  %v611 = vshrl.u32 %v610, 7
  %v612 = vsub.s32 3, %v611
  %v613 = vrot.slane %v596, %v612
  %v682 = vunpack.c.l.b16 %v532
  %v683 = vunpack.c.h.b16 %v532
  %v684 = vunpack.c.l.b16 %v533
  %v685 = vunpack.c.h.b16 %v533
  %v686 = vunpack.c.l.b16 %v534
  %v687 = vunpack.c.h.b16 %v534
  %v688 = vunpack.c.l.b16 %v535
  %v689 = vunpack.c.h.b16 %v535
  %v690 = vunpack.c.l.b16 %v536
  %v691 = vunpack.c.h.b16 %v536
  %v692 = vunpack.c.l.b16 %v537
  %v693 = vunpack.c.h.b16 %v537
  %v694 = vunpack.c.l.b16 %v538
  %v695 = vunpack.c.h.b16 %v538
  %v696 = vunpack.c.l.b16 %v539
  %v697 = vunpack.c.h.b16 %v539
  %v698 = vunpack.c.l.b16 %v540
  %v699 = vunpack.c.h.b16 %v540
  %v700 = vunpack.c.l.b16 %v541
  %v701 = vunpack.c.h.b16 %v541
  %v702 = vunpack.c.l.b16 %v542
  %v703 = vunpack.c.h.b16 %v542
  %v704 = vunpack.c.l.b16 %v543
  %v705 = vunpack.c.h.b16 %v543
  %v706 = vunpack.c.l.b16 %v544
  %v707 = vunpack.c.h.b16 %v544
  %v708 = vunpack.c.l.b16 %v545
  %v709 = vunpack.c.h.b16 %v545
  %v710 = vunpack.c.l.b16 %v546
  %v711 = vunpack.c.h.b16 %v546
  %v712 = vunpack.c.l.b16 %v547
  %v713 = vunpack.c.h.b16 %v547
  %v714 = vunpack.c.l.b16 %v548
  %v715 = vunpack.c.h.b16 %v548
  %v716 = vunpack.c.l.b16 %v549
  %v717 = vunpack.c.h.b16 %v549
  %v718 = vunpack.c.l.b16 %v550
  %v719 = vunpack.c.h.b16 %v550
  %v720 = vunpack.c.l.b16 %v551
  %v721 = vunpack.c.h.b16 %v551
  %v722 = vunpack.c.l.b16 %v552
  %v723 = vunpack.c.h.b16 %v552
  %v724 = vunpack.c.l.b16 %v553
  %v725 = vunpack.c.h.b16 %v553
  %v726 = vunpack.c.l.b16 %v554
  %v727 = vunpack.c.h.b16 %v554
  %v728 = vunpack.c.l.b16 %v555
  %v729 = vunpack.c.h.b16 %v555
  %v730 = vunpack.c.l.b16 %v556
  %v731 = vunpack.c.h.b16 %v556
  %v732 = vunpack.c.l.b16 %v557
  %v733 = vunpack.c.h.b16 %v557
  %v734 = vunpack.c.l.b16 %v558
  %v735 = vunpack.c.h.b16 %v558
  %v736 = vunpack.c.l.b16 %v559
  %v737 = vunpack.c.h.b16 %v559
  %v738 = vunpack.c.l.b16 %v560
  %v739 = vunpack.c.h.b16 %v560
  %v740 = vunpack.c.l.b16 %v561
  %v741 = vunpack.c.h.b16 %v561
  %v742 = vunpack.c.l.b16 %v562
  %v743 = vunpack.c.h.b16 %v562
  %v744 = vunpack.c.l.b16 %v563
  %v745 = vunpack.c.h.b16 %v563
  %v746 = vunpack.c.l.b16 %v564
  %v747 = vunpack.c.h.b16 %v564
  %v748 = vunpack.c.l.b16 %v565
  %v749 = vunpack.c.h.b16 %v565
  %v750 = vunpack.c.l.b16 %v566
  %v751 = vunpack.c.h.b16 %v566
  %v752 = vunpack.c.l.b16 %v567
  %v753 = vunpack.c.h.b16 %v567
  %v754 = vunpack.c.l.b16 %v568
  %v755 = vunpack.c.h.b16 %v568
  %v756 = vunpack.c.l.b16 %v569
  %v757 = vunpack.c.h.b16 %v569
  %v758 = vunpack.c.l.b16 %v570
  %v759 = vunpack.c.h.b16 %v570
  %v760 = vunpack.c.l.b16 %v571
  %v761 = vunpack.c.h.b16 %v571
  %v762 = vunpack.c.l.b16 %v572
  %v763 = vunpack.c.h.b16 %v572
  %v764 = vunpack.c.l.b16 %v573
  %v765 = vunpack.c.h.b16 %v573
  %v766 = vunpack.c.l.b16 %v574
  %v767 = vunpack.c.h.b16 %v574
  %v768 = vunpack.c.l.b16 %v575
  %v769 = vunpack.c.h.b16 %v575
  %v770 = vunpack.c.l.b16 %v576
  %v771 = vunpack.c.h.b16 %v576
  %v772 = vunpack.c.l.b16 %v577
  %v773 = vunpack.c.h.b16 %v577
  %v774 = vunpack.c.l.b16 %v578
  %v775 = vunpack.c.h.b16 %v578
  %v776 = vunpack.c.l.b16 %v579
  %v777 = vunpack.c.h.b16 %v579
  %v778 = vunpack.c.l.b16 %v580
  %v779 = vunpack.c.h.b16 %v580
  %v780 = vunpack.c.l.b16 %v581
  %v781 = vunpack.c.h.b16 %v581
  %v782 = vunpack.c.l.b16 %v582
  %v783 = vunpack.c.h.b16 %v582
  %v784 = vunpack.c.l.b16 %v583
  %v785 = vunpack.c.h.b16 %v583
  %v786 = vunpack.c.l.b16 %v584
  %v787 = vunpack.c.h.b16 %v584
  %v788 = vunpack.c.l.b16 %v585
  %v789 = vunpack.c.h.b16 %v585
  %v790 = vunpack.c.l.b16 %v586
  %v791 = vunpack.c.h.b16 %v586
  %v792 = vunpack.c.l.b16 %v587
  %v793 = vunpack.c.h.b16 %v587
  %v794 = vunpack.c.l.b16 %v588
  %v795 = vunpack.c.h.b16 %v588
  %v796 = vunpack.c.l.b16 %v589
  %v797 = vunpack.c.h.b16 %v589
  %v798 = vunpack.c.l.b16 %v590
  %v799 = vunpack.c.h.b16 %v590
  %v800 = vunpack.c.l.b16 %v591
  %v801 = vunpack.c.h.b16 %v591
  %v802 = vunpack.c.l.b16 %v592
  %v803 = vunpack.c.h.b16 %v592
  %v804 = vunpack.c.l.b16 %v593
  %v805 = vunpack.c.h.b16 %v593
  %v806 = vunpack.c.l.b16 %v594
  %v807 = vunpack.c.h.b16 %v594
  %v808 = vunpack.c.l.b16 %v595
  %v809 = vunpack.c.h.b16 %v595
  %v810 = vpack.c.b16 %v686, %v682
  %v811 = vpack.c.b16 %v687, %v683
  %v812 = vpack.c.b16 %v688, %v684
  %v813 = vpack.c.b16 %v689, %v685
  %v814 = vpack.c.b16 %v694, %v690
  %v815 = vpack.c.b16 %v695, %v691
  %v816 = vpack.c.b16 %v696, %v692
  %v817 = vpack.c.b16 %v697, %v693
  %v818 = vpack.c.b16 %v702, %v698
  %v819 = vpack.c.b16 %v703, %v699
  %v820 = vpack.c.b16 %v704, %v700
  %v821 = vpack.c.b16 %v705, %v701
  %v822 = vpack.c.b16 %v710, %v706
  %v823 = vpack.c.b16 %v711, %v707
  %v824 = vpack.c.b16 %v712, %v708
  %v825 = vpack.c.b16 %v713, %v709
  %v826 = vpack.c.b16 %v718, %v714
  %v827 = vpack.c.b16 %v719, %v715
  %v828 = vpack.c.b16 %v720, %v716
  %v829 = vpack.c.b16 %v721, %v717
  %v830 = vpack.c.b16 %v726, %v722
  %v831 = vpack.c.b16 %v727, %v723
  %v832 = vpack.c.b16 %v728, %v724
  %v833 = vpack.c.b16 %v729, %v725
  %v834 = vpack.c.b16 %v734, %v730
  %v835 = vpack.c.b16 %v735, %v731
  %v836 = vpack.c.b16 %v736, %v732
  %v837 = vpack.c.b16 %v737, %v733
  %v838 = vpack.c.b16 %v742, %v738
  %v839 = vpack.c.b16 %v743, %v739
  %v840 = vpack.c.b16 %v744, %v740
  %v841 = vpack.c.b16 %v745, %v741
  %v842 = vpack.c.b16 %v750, %v746
  %v843 = vpack.c.b16 %v751, %v747
  %v844 = vpack.c.b16 %v752, %v748
  %v845 = vpack.c.b16 %v753, %v749
  %v846 = vpack.c.b16 %v758, %v754
  %v847 = vpack.c.b16 %v759, %v755
  %v848 = vpack.c.b16 %v760, %v756
  %v849 = vpack.c.b16 %v761, %v757
  %v850 = vpack.c.b16 %v766, %v762
  %v851 = vpack.c.b16 %v767, %v763
  %v852 = vpack.c.b16 %v768, %v764
  %v853 = vpack.c.b16 %v769, %v765
  %v854 = vpack.c.b16 %v774, %v770
  %v855 = vpack.c.b16 %v775, %v771
  %v856 = vpack.c.b16 %v776, %v772
  %v857 = vpack.c.b16 %v777, %v773
  %v858 = vpack.c.b16 %v782, %v778
  %v859 = vpack.c.b16 %v783, %v779
  %v860 = vpack.c.b16 %v784, %v780
  %v861 = vpack.c.b16 %v785, %v781
  %v862 = vpack.c.b16 %v790, %v786
  %v863 = vpack.c.b16 %v791, %v787
  %v864 = vpack.c.b16 %v792, %v788
  %v865 = vpack.c.b16 %v793, %v789
  %v866 = vpack.c.b16 %v798, %v794
  %v867 = vpack.c.b16 %v799, %v795
  %v868 = vpack.c.b16 %v800, %v796
  %v869 = vpack.c.b16 %v801, %v797
  %v870 = vpack.c.b16 %v806, %v802
  %v871 = vpack.c.b16 %v807, %v803
  %v872 = vpack.c.b16 %v808, %v804
  %v873 = vpack.c.b16 %v809, %v805
  %938 = vmatprep.subr.bf16.mxu0 %v839
  %939 = vmatpush1.bf16.msra.mxu0 %v838
  %940 = vmatprep.subr.bf16.mxu0 %v835
  %941 = vmatpush1.bf16.msra.mxu0 %v834
  %942 = vmatprep.subr.bf16.mxu0 %v831
  %943 = vmatpush1.bf16.msra.mxu0 %v830
  %944 = vmatprep.subr.bf16.mxu0 %v827
  %945 = vmatpush1.bf16.msra.mxu0 %v826
  %946 = vmatprep.subr.bf16.mxu0 %v823
  %947 = vmatpush1.bf16.msra.mxu0 %v822
  %948 = vmatprep.subr.bf16.mxu0 %v819
  %949 = vmatpush1.bf16.msra.mxu0 %v818
  %950 = vmatprep.subr.bf16.mxu0 %v815
  %951 = vmatpush1.bf16.msra.mxu0 %v814
  %952 = vmatprep.subr.bf16.mxu0 %v811
  %953 = vmatpush1.bf16.msra.mxu0 %v810
  %954 = vmatprep.subr.bf16.mxu0 %v871
  %955 = vmatpush2.bf16.msra.mxu0 %v870
  %956 = vmatprep.subr.bf16.mxu0 %v867
  %957 = vmatpush2.bf16.msra.mxu0 %v866
  %958 = vmatprep.subr.bf16.mxu0 %v863
  %959 = vmatpush2.bf16.msra.mxu0 %v862
  %960 = vmatprep.subr.bf16.mxu0 %v859
  %961 = vmatpush2.bf16.msra.mxu0 %v858
  %962 = vmatprep.subr.bf16.mxu0 %v855
  %963 = vmatpush2.bf16.msra.mxu0 %v854
  %964 = vmatprep.subr.bf16.mxu0 %v851
  %965 = vmatpush2.bf16.msra.mxu0 %v850
  %966 = vmatprep.subr.bf16.mxu0 %v847
  %967 = vmatpush2.bf16.msra.mxu0 %v846
  %968 = vmatprep.subr.bf16.mxu0 %v843
  %969 = vmatpush2.bf16.msra.mxu0 %v842
  %970 = vmatprep.mubr.bf16.mxu0 %v531
  %971 = vmatmul.mubr.bf16.gmra.mxu0 %v530
  %v972 = vpop.f32.mrf.mxu0
  %v973 = vadd.f32 %v601, %v972
  %v974 = vpop.f32.mrf.mxu0
  %v975 = vadd.f32 %v605, %v974
  %v976 = vpop.f32.mrf.mxu0
  %v977 = vadd.f32 %v601, %v976
  %v978 = vpop.f32.mrf.mxu0
  %v979 = vadd.f32 %v605, %v978
  %980 = vdwg.mxu0
  %981 = vmatprep.subr.bf16.mxu0 %v841
  %982 = vmatpush1.bf16.msra.mxu0 %v840
  %983 = vmatprep.subr.bf16.mxu0 %v837
  %984 = vmatpush1.bf16.msra.mxu0 %v836
  %985 = vmatprep.subr.bf16.mxu0 %v833
  %986 = vmatpush1.bf16.msra.mxu0 %v832
  %987 = vmatprep.subr.bf16.mxu0 %v829
  %988 = vmatpush1.bf16.msra.mxu0 %v828
  %989 = vmatprep.subr.bf16.mxu0 %v825
  %990 = vmatpush1.bf16.msra.mxu0 %v824
  %991 = vmatprep.subr.bf16.mxu0 %v821
  %992 = vmatpush1.bf16.msra.mxu0 %v820
  %993 = vmatprep.subr.bf16.mxu0 %v817
  %994 = vmatpush1.bf16.msra.mxu0 %v816
  %995 = vmatprep.subr.bf16.mxu0 %v813
  %996 = vmatpush1.bf16.msra.mxu0 %v812
  %997 = vmatprep.subr.bf16.mxu0 %v873
  %998 = vmatpush2.bf16.msra.mxu0 %v872
  %999 = vmatprep.subr.bf16.mxu0 %v869
  %1000 = vmatpush2.bf16.msra.mxu0 %v868
  %1001 = vmatprep.subr.bf16.mxu0 %v865
  %1002 = vmatpush2.bf16.msra.mxu0 %v864
  %1003 = vmatprep.subr.bf16.mxu0 %v861
  %1004 = vmatpush2.bf16.msra.mxu0 %v860
  %1005 = vmatprep.subr.bf16.mxu0 %v857
  %1006 = vmatpush2.bf16.msra.mxu0 %v856
  %1007 = vmatprep.subr.bf16.mxu0 %v853
  %1008 = vmatpush2.bf16.msra.mxu0 %v852
  %1009 = vmatprep.subr.bf16.mxu0 %v849
  %1010 = vmatpush2.bf16.msra.mxu0 %v848
  %1011 = vmatprep.subr.bf16.mxu0 %v845
  %1012 = vmatpush2.bf16.msra.mxu0 %v844
  %1013 = vmatprep.mubr.bf16.mxu0 %v531
  %1014 = vmatmul.mubr.bf16.gmra.mxu0 %v530
  %v1015 = vpop.f32.mrf.mxu0
  %v1016 = vadd.f32 %v609, %v1015
  %v1017 = vpop.f32.mrf.mxu0
  %v1018 = vadd.f32 %v613, %v1017
  %v1019 = vpop.f32.mrf.mxu0
  %v1020 = vadd.f32 %v609, %v1019
  %v1021 = vpop.f32.mrf.mxu0
  %v1022 = vadd.f32 %v613, %v1021
  %1023 = vdwg.mxu0
  %v1024 = vmax.f32 %v973, 0.0
  %v1025 = vmax.f32 %v975, 0.0
  %v1026 = vmax.f32 %v1016, 0.0
  %v1027 = vmax.f32 %v1018, 0.0
  %v1028 = vmax.f32 %v977, 0.0
  %v1029 = vmax.f32 %v979, 0.0
  %v1030 = vmax.f32 %v1020, 0.0
  %v1031 = vmax.f32 %v1022, 0.0
  %1032 = vst [vmem:[%s5] sm:$0xff] %v1024
  %1033 = vst [vmem:[%s5 + $0x8] sm:$0xff] %v1025
  %1034 = vst [vmem:[%s5 + $0x10] sm:$0xff] %v1026
  %1035 = vst [vmem:[%s5 + $0x18] sm:$0xff] %v1027
  %1036 = vst [vmem:[%s5 + $0x20] sm:$0xff] %v1028
  %1037 = vst [vmem:[%s5 + $0x28] sm:$0xff] %v1029
  %1038 = vst [vmem:[%s5 + $0x30] sm:$0xff] %v1030
  %1039 = vst [vmem:[%s5 + $0x38] sm:$0xff] %v1031
  // Predicated region
  $region22: #{image_encoder_forward.1} parent=0 // pred_check
    _
  $region23: #{image_encoder_forward.1} parent=0 // pred_check_branch
    %1041 = sbr.rel (0) target = $region25
  $region24: #{image_encoder_forward.1} parent=0 // pred_region
    _
  $region25: #{image_encoder_forward.1} parent=0 // pred_fallthru
    _
  // Predicated region
  $region26: #{image_encoder_forward.1} parent=0 // pred_check
    _
  $region27: #{image_encoder_forward.1} parent=0 // pred_check_branch
    %1043 = sbr.rel (0) target = $region29
  $region28: #{image_encoder_forward.1} parent=0 // pred_region
    _
  $region29: #{image_encoder_forward.1} parent=0 // pred_fallthru
    _

</llo_original>
